<compile_context>
chip_gen: v6e
topology: v6e:2x2x1
jax: 0.10.0
libtpu: 0.0.40
codegen_flags: <defaults>
</compile_context>

<pallas_src>
import functools

import jax
import jax.numpy as jnp
from jax.experimental import pallas as pl
from jax.experimental.pallas import tpu as pltpu

TM = 512                       # voxel-column tile (lane-dense, multiple of 128)
EPS = 1e-4                     # BatchNorm1d eps
VMEM_LIMIT = 48 * 1024 * 1024  # safe on v5e/v6e (128 MiB) and v7x (64 MiB)


def _round_up(x, m):
    return ((x + m - 1) // m) * m


# --------------------------------------------------------------------------
# Padded-flat channels-first layout for one resolution level
# --------------------------------------------------------------------------
class Layout:
    def __init__(self, n, d, h, w, tm=TM):
        self.n, self.d, self.h, self.w = n, d, h, w
        self.tm = tm
        self.dp, self.hp, self.wp = d + 2, h + 2, w + 2
        self.core = n * self.dp * self.hp * self.wp   # padded-volume voxels
        self.m_real = n * d * h * w                   # real voxels
        self.halo = self.hp * self.wp + self.wp + 1   # max |tap shift|
        lead_tiles = -(-self.halo // tm)
        core_tiles = -(-self.core // tm)
        self.lead = lead_tiles * tm
        self.total = (lead_tiles + core_tiles + lead_tiles) * tm
        self.n_tiles = self.total // tm
        offs = []
        for dz in (-1, 0, 1):
            for dy in (-1, 0, 1):
                for dx in (-1, 0, 1):
                    offs.append(dz * self.hp * self.wp + dy * self.wp + dx)
        self.offsets = tuple(offs)
        # real-voxel mask in padded-flat coordinates (1.0 = real, 0.0 = halo/pad)
        m = jnp.zeros((n, self.dp, self.hp, self.wp), jnp.float32)
        m = m.at[:, 1:-1, 1:-1, 1:-1].set(1.0)
        m = m.reshape(1, self.core)
        self.mask = jnp.pad(m, ((0, 0),
                                (self.lead, self.total - self.lead - self.core)))


def to_padded_flat(xd, lay):
    """(C, N, D, H, W) dense -> (C, total) padded-flat (zero halos/margins)."""
    c = xd.shape[0]
    xp = jnp.pad(xd, ((0, 0), (0, 0), (1, 1), (1, 1), (1, 1)))
    flat = xp.reshape(c, lay.core)
    return jnp.pad(flat, ((0, 0), (lay.lead, lay.total - lay.lead - lay.core)))


def from_padded_flat(xf, lay):
    """(C, total) padded-flat -> (C, N, D, H, W) dense interior."""
    c = xf.shape[0]
    xp = xf[:, lay.lead:lay.lead + lay.core].reshape(
        c, lay.n, lay.dp, lay.hp, lay.wp)
    return xp[:, :, 1:-1, 1:-1, 1:-1]


# --------------------------------------------------------------------------
# Pallas kernels
# --------------------------------------------------------------------------
def _subm_conv_kernel(*refs, offsets, tm, total, ident_mode):
    """Fused BN(scale/shift)+ReLU -> 3x3x3 conv -> (+identity) -> mask -> stats.

    Per grid step: DMA the 27 shifted (Cin, TM) tap windows (and mask windows)
    straight from HBM, accumulate bf16 tap matmuls in f32, then mask halos and
    emit per-tile channel sum / sum-of-squares for the consumer BatchNorm.
    """
    n_taps = len(offsets)
    x_hbm, m_hbm, sc_ref, sh_ref, w_ref = refs[:5]
    pos = 5
    id_ref = wi_ref = None
    if ident_mode == "add":
        id_ref = refs[pos]
        pos += 1
    elif ident_mode == "proj":
        id_ref, wi_ref = refs[pos], refs[pos + 1]
        pos += 2
    out_ref, st_ref, xbuf, mbuf, xsem, msem = refs[pos:pos + 6]

    base = pl.program_id(0) * tm
    xcopies, mcopies = [], []
    for t, off in enumerate(offsets):
        # Clamp keeps margin-tile reads in bounds; core tiles are never clamped.
        start = jnp.clip(base + off, 0, total - tm)
        cx = pltpu.make_async_copy(x_hbm.at[:, pl.ds(start, tm)],
                                   xbuf.at[t], xsem.at[t])
        cm = pltpu.make_async_copy(m_hbm.at[:, pl.ds(start, tm)],
                                   mbuf.at[t], msem.at[t])
        cx.start()
        cm.start()
        xcopies.append(cx)
        mcopies.append(cm)

    sc = sc_ref[...]                      # (Cin, 1)
    sh = sh_ref[...]                      # (Cin, 1)
    cout = out_ref.shape[0]
    acc = jnp.zeros((cout, tm), jnp.float32)
    for t in range(n_taps):
        xcopies[t].wait()
        mcopies[t].wait()
        # BN affine + ReLU in f32 on the VPU; mask so the conv sees zeros at
        # halo positions (dense zero-padding happens *after* BN+ReLU).
        ht = jnp.maximum(xbuf[t] * sc + sh, 0.0) * mbuf[t]
        acc = acc + jnp.dot(w_ref[t], ht.astype(jnp.bfloat16),
                            preferred_element_type=jnp.float32)

    if ident_mode == "add":
        acc = acc + id_ref[...]
    elif ident_mode == "proj":
        acc = acc + jnp.dot(wi_ref[...], id_ref[...].astype(jnp.bfloat16),
                            preferred_element_type=jnp.float32)

    out = acc * mbuf[n_taps // 2]         # center tap == mask of output columns
    out_ref[...] = out
    s1 = jnp.sum(out, axis=1, keepdims=True)
    s2 = jnp.sum(out * out, axis=1, keepdims=True)
    st_ref[...] = jnp.concatenate([s1, s2], axis=1)[None]


def _fused_mm_kernel(g_ref, sc_ref, sh_ref, w_ref, m_ref, out_ref, st_ref):
    """BN(scale/shift)+ReLU -> W @ x -> column mask -> per-tile channel stats."""
    h = jnp.maximum(g_ref[...] * sc_ref[...] + sh_ref[...], 0.0)
    y = jnp.dot(w_ref[...], h.astype(jnp.bfloat16),
                preferred_element_type=jnp.float32)
    y = y * m_ref[...]
    out_ref[...] = y
    s1 = jnp.sum(y, axis=1, keepdims=True)
    s2 = jnp.sum(y * y, axis=1, keepdims=True)
    st_ref[...] = jnp.concatenate([s1, s2], axis=1)[None]


def _stats_kernel(x_ref, st_ref):
    """Per-tile channel [sum, sum-of-squares] (used once, for the block input)."""
    x = x_ref[...]
    s1 = jnp.sum(x, axis=1, keepdims=True)
    s2 = jnp.sum(x * x, axis=1, keepdims=True)
    st_ref[...] = jnp.concatenate([s1, s2], axis=1)[None]


# --------------------------------------------------------------------------
# Kernel wrappers
# --------------------------------------------------------------------------
def subm_conv(x, scale, shift, w, lay, ident_mode="none", ident_x=None, wi=None):
    """Fused [BN+ReLU -> SubMConv3d(k=3,p=1) (+identity)] on padded-flat feats."""
    cin = x.shape[0]
    cout = w.shape[1]
    tm, n_tiles, total = lay.tm, lay.n_tiles, lay.total

    kernel = functools.partial(_subm_conv_kernel, offsets=lay.offsets, tm=tm,
                               total=total, ident_mode=ident_mode)
    in_specs = [
        pl.BlockSpec(memory_space=pl.ANY),                      # features (HBM)
        pl.BlockSpec(memory_space=pl.ANY),                      # mask (HBM)
        pl.BlockSpec((cin, 1), lambda i: (0, 0)),               # BN scale
        pl.BlockSpec((cin, 1), lambda i: (0, 0)),               # BN shift
        pl.BlockSpec((27, cout, cin), lambda i: (0, 0, 0)),     # conv weights
    ]
    inputs = [x, lay.mask, scale, shift, w.astype(jnp.bfloat16)]
    if ident_mode == "add":
        in_specs.append(pl.BlockSpec((ident_x.shape[0], tm), lambda i: (0, i)))
        inputs.append(ident_x)
    elif ident_mode == "proj":
        in_specs.append(pl.BlockSpec((ident_x.shape[0], tm), lambda i: (0, i)))
        inputs.append(ident_x)
        in_specs.append(pl.BlockSpec(wi.shape, lambda i: (0, 0)))
        inputs.append(wi.astype(jnp.bfloat16))

    out, pstats = pl.pallas_call(
        kernel,
        out_shape=(jax.ShapeDtypeStruct((cout, total), jnp.float32),
                   jax.ShapeDtypeStruct((n_tiles, cout, 2), jnp.float32)),
        grid=(n_tiles,),
        in_specs=in_specs,
        out_specs=(pl.BlockSpec((cout, tm), lambda i: (0, i)),
                   pl.BlockSpec((1, cout, 2), lambda i: (i, 0, 0))),
        scratch_shapes=[pltpu.VMEM((27, cin, tm), jnp.float32),
                        pltpu.VMEM((27, 1, tm), jnp.float32),
                        pltpu.SemaphoreType.DMA((27,)),
                        pltpu.SemaphoreType.DMA((27,))],
        compiler_params=pltpu.CompilerParams(
            dimension_semantics=("parallel",),
            vmem_limit_bytes=VMEM_LIMIT),
    )(*inputs)
    return out, jnp.sum(pstats, axis=0)          # (cout, total), (cout, 2)


def fused_mm(g, scale, shift, w_bf16, colmask, tmc):
    """Fused [BN+ReLU -> matmul -> mask -> stats] on a pre-gathered (K, Mp)."""
    k, mp = g.shape
    r = w_bf16.shape[0]
    n_t = mp // tmc
    out, pstats = pl.pallas_call(
        _fused_mm_kernel,
        out_shape=(jax.ShapeDtypeStruct((r, mp), jnp.float32),
                   jax.ShapeDtypeStruct((n_t, r, 2), jnp.float32)),
        grid=(n_t,),
        in_specs=[pl.BlockSpec((k, tmc), lambda i: (0, i)),
                  pl.BlockSpec((k, 1), lambda i: (0, 0)),
                  pl.BlockSpec((k, 1), lambda i: (0, 0)),
                  pl.BlockSpec((r, k), lambda i: (0, 0)),
                  pl.BlockSpec((1, tmc), lambda i: (0, i))],
        out_specs=(pl.BlockSpec((r, tmc), lambda i: (0, i)),
                   pl.BlockSpec((1, r, 2), lambda i: (i, 0, 0))),
        compiler_params=pltpu.CompilerParams(
            dimension_semantics=("parallel",),
            vmem_limit_bytes=VMEM_LIMIT),
    )(g, scale, shift, w_bf16, colmask)
    return out, pstats


def input_stats(x, lay):
    """Standalone stats kernel (only needed for the top-level block input)."""
    c = x.shape[0]
    pstats = pl.pallas_call(
        _stats_kernel,
        out_shape=jax.ShapeDtypeStruct((lay.n_tiles, c, 2), jnp.float32),
        grid=(lay.n_tiles,),
        in_specs=[pl.BlockSpec((c, lay.tm), lambda i: (0, i))],
        out_specs=pl.BlockSpec((1, c, 2), lambda i: (i, 0, 0)),
        compiler_params=pltpu.CompilerParams(
            dimension_semantics=("parallel",),
            vmem_limit_bytes=VMEM_LIMIT),
    )(x)
    return jnp.sum(pstats, axis=0)


# --------------------------------------------------------------------------
# BatchNorm affine from fused statistics (training-mode batch stats)
# --------------------------------------------------------------------------
def bn_affine(stats, m_real, bn):
    gamma, beta = bn
    mean = stats[:, 0] / m_real
    var = jnp.maximum(stats[:, 1] / m_real - mean * mean, 0.0)   # clamp >= 0
    inv = jax.lax.rsqrt(var + EPS)
    a = gamma * inv
    b = beta - mean * a
    return a[:, None].astype(jnp.float32), b[:, None].astype(jnp.float32)


# --------------------------------------------------------------------------
# Down / up sampling convs (BN+ReLU+matmul fused; gather/scatter in plain JAX)
# --------------------------------------------------------------------------
def down_conv(x, x_stats, bn, w, lay, tm=TM):
    """BN -> ReLU -> SparseConv3d(k=2, s=2) (dense-equivalent)."""
    cin = x.shape[0]
    cout = w.shape[0]
    a, b = bn_affine(x_stats, lay.m_real, bn)
    xd = from_padded_flat(x, lay)                       # (cin, n, d, h, w)
    taps = [xd[:, :, dz::2, dy::2, dx::2]
            for dz in (0, 1) for dy in (0, 1) for dx in (0, 1)]
    g = jnp.stack(taps, 0).reshape(8 * cin, -1)         # row = tap*cin + c
    m2 = g.shape[1]
    lay2 = Layout(lay.n, lay.d // 2, lay.h // 2, lay.w // 2, tm)
    tmc = min(TM, _round_up(m2, 128))
    mp = _round_up(m2, tmc)
    g = jnp.pad(g, ((0, 0), (0, mp - m2)))
    colmask = (jnp.arange(mp) < m2).astype(jnp.float32)[None, :]
    a8 = jnp.tile(a, (8, 1))
    b8 = jnp.tile(b, (8, 1))
    y, pstats = fused_mm(g, a8, b8, w.astype(jnp.bfloat16), colmask, tmc)
    stats = jnp.sum(pstats, axis=0)                     # (cout, 2)
    yd = y[:, :m2].reshape(cout, lay.n, lay.d // 2, lay.h // 2, lay.w // 2)
    return to_padded_flat(yd, lay2), stats, lay2


def up_conv(y, y_stats, bn, w, lay2, lay):
    """BN -> ReLU -> SparseInverseConv3d(k=2) (dense transposed conv, s=2)."""
    cin = y.shape[0]
    cout = w.shape[0] // 8
    a, b = bn_affine(y_stats, lay2.m_real, bn)
    yd = from_padded_flat(y, lay2).reshape(cin, -1)     # (cin, m2)
    m2 = yd.shape[1]
    tmc = min(TM, _round_up(m2, 128))
    mp = _round_up(m2, tmc)
    yd = jnp.pad(yd, ((0, 0), (0, mp - m2)))
    colmask = (jnp.arange(mp) < m2).astype(jnp.float32)[None, :]
    z, pstats = fused_mm(yd, a, b, w.astype(jnp.bfloat16), colmask, tmc)
    stats = jnp.sum(pstats, axis=0).reshape(8, cout, 2).sum(axis=0)
    d2, h2, w2 = lay2.d, lay2.h, lay2.w
    zd = z[:, :m2].reshape(2, 2, 2, cout, lay.n, d2, h2, w2)
    zd = jnp.transpose(zd, (3, 4, 5, 0, 6, 1, 7, 2))
    zd = zd.reshape(cout, lay.n, lay.d, lay.h, lay.w)
    return to_padded_flat(zd, lay), stats


# --------------------------------------------------------------------------
# Parameter init (deterministic)
# --------------------------------------------------------------------------
def _init_bn(key, c):
    k1, k2 = jax.random.split(key)
    return (1.0 + 0.1 * jax.random.normal(k1, (c,), jnp.float32),
            0.1 * jax.random.normal(k2, (c,), jnp.float32))


def _init_w(key, shape, fan_in):
    return jax.random.normal(key, shape, jnp.float32) / jnp.sqrt(jnp.float32(fan_in))


def init_resblock(key, cin, cout):
    ks = jax.random.split(key, 5)
    p = {"cin": cin, "cout": cout}
    p["bn1"] = _init_bn(ks[0], cin)
    p["conv1_w"] = _init_w(ks[1], (27, cout, cin), 27 * cin)
    p["bn2"] = _init_bn(ks[2], cout)
    p["conv2_w"] = _init_w(ks[3], (27, cout, cout), 27 * cout)
    if cin != cout:
        p["i_w"] = _init_w(ks[4], (cout, cin), cin)     # 1x1x1 identity branch
    return p


def init_ublock(key, nPlanes, block_reps=2):
    ks = jax.random.split(key, 7)
    p = {"nPlanes": tuple(nPlanes)}
    bkeys = jax.random.split(ks[0], block_reps)
    p["blocks"] = [init_resblock(bkeys[i], nPlanes[0], nPlanes[0])
                   for i in range(block_reps)]
    if len(nPlanes) > 1:
        p["conv_bn"] = _init_bn(ks[1], nPlanes[0])
        p["conv_w"] = _init_w(ks[2], (nPlanes[1], 8 * nPlanes[0]), 8 * nPlanes[0])
        p["u"] = init_ublock(ks[3], nPlanes[1:], block_reps)
        p["deconv_bn"] = _init_bn(ks[4], nPlanes[1])
        p["deconv_w"] = _init_w(ks[5], (8 * nPlanes[0], nPlanes[1]), nPlanes[1])
        tkeys = jax.random.split(ks[6], block_reps)
        p["blocks_tail"] = [init_resblock(tkeys[i], nPlanes[0] * (2 - i), nPlanes[0])
                            for i in range(block_reps)]
    return p


# --------------------------------------------------------------------------
# Forward pass (mirrors the PyTorch module, normalize_before=True)
# --------------------------------------------------------------------------
def resblock_forward(p, x, x_stats, lay):
    cin, cout = p["cin"], p["cout"]
    a1, b1 = bn_affine(x_stats, lay.m_real, p["bn1"])
    h1, h1_stats = subm_conv(x, a1, b1, p["conv1_w"], lay, "none")
    a2, b2 = bn_affine(h1_stats, lay.m_real, p["bn2"])
    if cin == cout:
        return subm_conv(h1, a2, b2, p["conv2_w"], lay, "add", ident_x=x)
    return subm_conv(h1, a2, b2, p["conv2_w"], lay, "proj",
                     ident_x=x, wi=p["i_w"])


def ublock_forward(p, x, x_stats, lay):
    for bp in p["blocks"]:
        x, x_stats = resblock_forward(bp, x, x_stats, lay)
    if len(p["nPlanes"]) > 1:
        identity, id_stats = x, x_stats
        # encoder: BN -> ReLU -> SparseConv3d(k=2, s=2)
        y, y_stats, lay2 = down_conv(x, x_stats, p["conv_bn"], p["conv_w"], lay)
        # recursive U
        y, y_stats = ublock_forward(p["u"], y, y_stats, lay2)
        # decoder: BN -> ReLU -> SparseInverseConv3d(k=2)
        d, d_stats = up_conv(y, y_stats, p["deconv_bn"], p["deconv_w"], lay2, lay)
        # skip-connection concat along channels (stats concatenate per-channel)
        x = jnp.concatenate([identity, d], axis=0)
        x_stats = jnp.concatenate([id_stats, d_stats], axis=0)
        for bp in p["blocks_tail"]:
            x, x_stats = resblock_forward(bp, x, x_stats, lay)
    return x, x_stats


def ublock_apply(params, x_ncdhw):
    n, _, d, h, w = x_ncdhw.shape
    lay = Layout(n, d, h, w, TM)
    xf = to_padded_flat(jnp.transpose(x_ncdhw, (1, 0, 2, 3, 4)), lay)
    stats = input_stats(xf, lay)
    yf, _ = ublock_forward(params, xf, stats, lay)
    yd = from_padded_flat(yf, lay)                         # (C, N, D, H, W)
    return jnp.transpose(yd, (1, 2, 3, 4, 0)).reshape(n * d * h * w, -1)


if __name__ == "__main__":
    key = jax.random.PRNGKey(0)
    kx, kp = jax.random.split(key)

    N, C0, D = 2, 4, 8
    nPlanes = [4, 8]

    x_ncdhw = jax.random.normal(kx, (N, C0, D, D, D), jnp.float32)
    params = init_ublock(kp, nPlanes, block_reps=2)

    out = ublock_apply(params, x_ncdhw)
    out = jax.block_until_ready(out)

    assert out.shape == (N * D * D * D, nPlanes[0])
    assert bool(jnp.all(jnp.isfinite(out)))
    print("KERNEL_OK")
</pallas_src>

<mosaic_0001>
module attributes {stable_mosaic.version = 11 : i64} {
  func.func @_stats_kernel(%arg0: i32, %arg1: memref<4x512xf32, #tpu.memory_space<vmem>>, %arg2: memref<1x4x2xf32, #tpu.memory_space<vmem>>) attributes {dimension_semantics = [#tpu.dimension_semantics<parallel>], iteration_bounds = array<i64: 6>, scalar_prefetch = 0 : i64, scratch_operands = 0 : i64, tpu.core_type = #tpu.core_type<tc>, window_params = [{transform_indices = @transform_0, window_bounds = array<i64: 4, 512>}, {transform_indices = @transform_1, window_bounds = array<i64: 1, 4, 2>}]} {
    %c0 = arith.constant 0 : index
    %c0_0 = arith.constant 0 : index
    %0 = vector.load %arg1[%c0, %c0_0] : memref<4x512xf32, #tpu.memory_space<vmem>>, vector<4x512xf32>
    %cst = arith.constant dense<0.000000e+00> : vector<4xf32>
    %1 = vector.multi_reduction <add>, %0, %cst [1] : vector<4x512xf32> to vector<4xf32>
    %2 = vector.shape_cast %1 : vector<4xf32> to vector<4x1xf32>
    %3 = arith.mulf %0, %0 : vector<4x512xf32>
    %cst_1 = arith.constant dense<0.000000e+00> : vector<4xf32>
    %4 = vector.multi_reduction <add>, %3, %cst_1 [1] : vector<4x512xf32> to vector<4xf32>
    %5 = vector.shape_cast %4 : vector<4xf32> to vector<4x1xf32>
    %6 = tpu.concatenate %2, %5 in 1 : vector<4x1xf32>, vector<4x1xf32> -> vector<4x2xf32>
    %7 = vector.shape_cast %6 : vector<4x2xf32> to vector<1x4x2xf32>
    %c0_2 = arith.constant 0 : index
    %c0_3 = arith.constant 0 : index
    %c0_4 = arith.constant 0 : index
    %8 = vector.load %arg2[%c0_2, %c0_3, %c0_4] : memref<1x4x2xf32, #tpu.memory_space<vmem>>, vector<1x4x2xf32>
    tpu.vector_store %arg2[%c0_2, %c0_3, %c0_4], %7 {strides = array<i32>} : memref<1x4x2xf32, #tpu.memory_space<vmem>>, vector<1x4x2xf32>,
    return
  }
  func.func @transform_0(%arg0: i32) -> (i32, i32) {
    %c0_i32 = arith.constant 0 : i32
    %c0_i32_0 = arith.constant 0 : i32
    return %c0_i32, %arg0 : i32, i32
  }
  func.func @transform_1(%arg0: i32) -> (i32, i32, i32) {
    %c0_i32 = arith.constant 0 : i32
    %c0_i32_0 = arith.constant 0 : i32
    %c0_i32_1 = arith.constant 0 : i32
    return %arg0, %c0_i32, %c0_i32_0 : i32, i32, i32
  }
}

</mosaic_0001>

<llo_original>
// kernel: tpu_custom_call.1
$region0: #{tpu_custom_call.1}
  #allocation0 [shape = 'u32[]', space=smem, size = 0x4, offset = 0x4, fixed_abs, tag = 'smem constant byte address 0x4 - core index']
  #allocation1 [shape = 'u32[144,128]{1,0:T(1,128)}', space=vmem, size = 0x12000, scoped, tag = 'internal scratch']
  %s0 = inlined_call_operand.hbm [shape: f32[4,3072], index: 0, kind: input, shape index: {}]
  %s1 = inlined_call_operand.vmem [shape: f32[6,4,2], index: 1, kind: output, shape index: {}]
  %s2 = sld [smem:[#allocation0]]
  $region41: #{tpu_custom_call.1} parent=0
    _
  %s4 = ssub.s32 1, %s2
  %s5 = scalar_select 0, %s4, %s2
  $region1: #{tpu_custom_call.1} parent=0
    #allocation2 [shape = 'u8[16384]{0}', space=vmem, size = 0x4000, scoped, tag = 'input window, operand 0']
    #allocation3 [shape = 's32[2]{0}', space=sflag, size = 0x8, scoped, tag = 'scoped memory for tpu_custom_call.1']
    %6 = vsyncpa [#allocation3], 0
    %s7 = scalar_lea.sflag [#allocation3], 1
    %8 = vsyncpa %s7, 0
    loop: start=0, step=1, limit=8
    $region2: #{tpu_custom_call.1} parent=1 // loop_pre_header
      _
    $region3: #{tpu_custom_call.1} parent=1 // loop_header
      %s10 = sphi 0, %s14
      %p11 = scmp.ge.s32.totalorder %s10, 8
      %s20 = sphi 0, %s22
      %s23 = sphi 0, %s20
      %s24 = sphi 0, %s23
      %s40 = sphi 0, %s24
      %s46 = sphi 0, %s48
      %s49 = sphi 0, %s46
      %s50 = sphi 0, %s49
      %s66 = sphi 0, %s50
    $region4: #{tpu_custom_call.1} parent=1 // loop_header_branch
      %13 = sbr.rel (%p11) target = $region8
    $region5: #{tpu_custom_call.1} parent=1 // loop_body
      %s15 = ssub.s32 %s10, 1
      %s16 = ssub.s32 %s10, 2
      %s17 = sadd.s32 %s10, 1
      %s18 = ssub.s32 %s10, %s17
      %p19 = scmp.eq.s32.totalorder %s18, 0
      %s21 = sadd.s32 %s20, 1
      %s22 = scalar_select %p19, %s20, %s21
      %p25 = pneg %p19
      %p26 = scmp.eq.s32.totalorder %s10, 5
      %p27 = por %p25, %p26
      %p28 = scmp.ne.s32.totalorder %s20, %s23
      %p29 = scmp.eq.s32.totalorder %s10, 0
      %p30 = por %p28, %p29
      %p31 = scmp.ne.s32.totalorder %s20, %s23
      %p32 = scmp.eq.s32.totalorder %s15, 5
      %p33 = por %p31, %p32
      %p34 = scmp.ne.s32.totalorder %s23, %s24
      %p35 = scmp.eq.s32.totalorder %s15, 0
      %p36 = por %p34, %p35
      %p37 = scmp.ne.s32.totalorder %s23, %s24
      %p38 = scmp.eq.s32.totalorder %s16, 5
      %p39 = por %p37, %p38
      %p41 = scmp.ne.s32.totalorder %s24, %s40
      %p42 = scmp.eq.s32.totalorder %s16, 0
      %p43 = por %p41, %p42
      %s44 = ssub.s32 %s10, %s17
      %p45 = scmp.eq.s32.totalorder %s44, 0
      %s47 = sadd.s32 %s46, 1
      %s48 = scalar_select %p45, %s46, %s47
      %p51 = pneg %p45
      %p52 = scmp.eq.s32.totalorder %s10, 5
      %p53 = por %p51, %p52
      %p54 = scmp.ne.s32.totalorder %s46, %s49
      %p55 = scmp.eq.s32.totalorder %s10, 0
      %p56 = por %p54, %p55
      %p57 = scmp.ne.s32.totalorder %s46, %s49
      %p58 = scmp.eq.s32.totalorder %s15, 5
      %p59 = por %p57, %p58
      %p60 = scmp.ne.s32.totalorder %s49, %s50
      %p61 = scmp.eq.s32.totalorder %s15, 0
      %p62 = por %p60, %p61
      %p63 = scmp.ne.s32.totalorder %s49, %s50
      %p64 = scmp.eq.s32.totalorder %s16, 5
      %p65 = por %p63, %p64
      %p67 = scmp.ne.s32.totalorder %s50, %s66
      %p68 = scmp.eq.s32.totalorder %s16, 0
      %p69 = por %p67, %p68
      %p70 = scmp.le.s32.totalorder 1, %s10
      %p71 = scmp.lt.s32.totalorder %s10, 7
      %p72 = pnand %p70, %p71
      %p73 = pneg %p72
      // Predicated region
      $region9: #{tpu_custom_call.1} parent=5 // pred_check
        _
      $region10: #{tpu_custom_call.1} parent=5 // pred_check_branch
        %75 = sbr.rel (%p72) target = $region12
      $region11: #{tpu_custom_call.1} parent=5 // pred_region
        %s76 = ssub.s32 %s10, 1
      $region12: #{tpu_custom_call.1} parent=5 // pred_fallthru
        _
      %p77 = scmp.lt.s32.totalorder %s10, 6
      // Predicated region
      $region13: #{tpu_custom_call.1} parent=5 // pred_check
        %p78 = pneg %p77
      $region14: #{tpu_custom_call.1} parent=5 // pred_check_branch
        %80 = sbr.rel (%p78) target = $region16
      $region15: #{tpu_custom_call.1} parent=5 // pred_region
        // Predicated region
        $region17: #{tpu_custom_call.1} parent=15 // pred_check
          %p81 = pneg %p30
        $region18: #{tpu_custom_call.1} parent=15 // pred_check_branch
          %83 = sbr.rel (%p81) target = $region20
        $region19: #{tpu_custom_call.1} parent=15 // pred_region
          %s84 = sand.u32 %s20, 1
          %s85 = scalar_lea.sflag [#allocation3], %s84
          %s86 = sand.u32 %s20, 1
          %s87 = smul.addr %s86, 16
          %s88 = scalar_lea.vmem [#allocation2], %s87
          %s89 = smul.u32 4, %s10
          %s91 = ssub.s32 256, 256
          %92 = vsyncadd %s85, %s91
          %s93 = smul.addr %s89, 64
          %s94 = scalar_lea.hbm %s0, %s93
          %s96 = sshll.u32 %s88, 4
          %s97 = int_to_ptr.vmem [resolvable:$true] %s96
          %99 = dma.hbm_to_vmem [thread:$0]  %s94, 256, %s97, %s85
        $region20: #{tpu_custom_call.1} parent=15 // pred_fallthru
          _
      $region16: #{tpu_custom_call.1} parent=5 // pred_fallthru
        _
      %p100 = scmp.le.s32.totalorder 1, %s10
      %p101 = scmp.lt.s32.totalorder %s10, 7
      %p102 = pnand %p100, %p101
      %p103 = pneg %p102
      // Predicated region
      $region21: #{tpu_custom_call.1} parent=5 // pred_check
        _
      $region22: #{tpu_custom_call.1} parent=5 // pred_check_branch
        %105 = sbr.rel (%p102) target = $region24
      $region23: #{tpu_custom_call.1} parent=5 // pred_region
        %s106 = ssub.s32 %s10, 1
        %s107 = sand.u32 %s23, 1
        %s108 = scalar_lea.sflag [#allocation3], %s107
        %s109 = sand.u32 %s23, 1
        %s110 = smul.addr %s109, 16
        %s111 = scalar_lea.vmem [#allocation2], %s110
        // Predicated region
        $region25: #{tpu_custom_call.1} parent=23 // pred_check
          %p112 = pneg %p36
        $region26: #{tpu_custom_call.1} parent=23 // pred_check_branch
          %114 = sbr.rel (%p112) target = $region28
        $region27: #{tpu_custom_call.1} parent=23 // pred_region
          %115 = dma.done %s108, 256
        $region28: #{tpu_custom_call.1} parent=23 // pred_fallthru
          _
        %s116 = sand.u32 %s23, 1
        %s117 = scalar_lea.sflag [#allocation3], %s116
        %s118 = sand.u32 %s23, 1
        %s119 = smul.addr %s118, 16
        %s120 = scalar_lea.vmem [#allocation2], %s119
        %p121 = pneg %p36
        %p122 = pneg %p33
        %p123 = pneg %p62
        %p124 = pneg %p59
        %p125 = scmp.lt.s32.totalorder %s15, 5
        %s126 = scalar_select %p125, %s15, 5
        %s127 = smul.addr %s126, 4
        %s128 = scalar_lea.vmem %s1, %s127
        %s129 = smul.u32 4, %s15
        %p130 = scmp.lt.s32.totalorder %s15, 5
        %s131 = scalar_select %p130, %s15, 5
        %s132 = smul.addr %s131, 4
        %s133 = scalar_lea.vmem %s1, %s132
        %v134 = vld [vmem:[%s111] sm:$0xff]
        %v135 = vld [vmem:[%s111 + $0x8] sm:$0xff]
        %v138 = vcombine.high %v134, %v134
        %v139 = vcombine.high %v135, %v135
        %vm142 = vcmask 1043456
        %v143 = vsel %vm142, %v134, 0.0
        %v144 = vsel %vm142, %v138, 0.0
        %v145 = vadd.f32 %v143, %v144
        %v146 = vsel %vm142, %v135, 0.0
        %v147 = vadd.f32 %v145, %v146
        %v148 = vsel %vm142, %v139, 0.0
        %v149 = vadd.f32 %v147, %v148
        %150 = vadd.xlane.f32.xlu0 %v149
        %v151 = vpop.xlane.xlu0 %150
        %v152 = vmul.f32 %v134, %v134
        %v153 = vmul.f32 %v135, %v135
        %v156 = vcombine.high %v152, %v152
        %v157 = vcombine.high %v153, %v153
        %v160 = vsel %vm142, %v152, 0.0
        %v161 = vsel %vm142, %v156, 0.0
        %v162 = vadd.f32 %v160, %v161
        %v163 = vsel %vm142, %v153, 0.0
        %v164 = vadd.f32 %v162, %v163
        %v165 = vsel %vm142, %v157, 0.0
        %v166 = vadd.f32 %v164, %v165
        %167 = vadd.xlane.f32.xlu0 %v166
        %v168 = vpop.xlane.xlu0 %167
        %vm169 = vcmask 7168
        %v170 = vsel %vm169, %v151, %v168
        %vm171 = vcmask 11264
        %172 = vst.msk [vmem:[%s133] sm:$0xf] %vm171, %v170
        %p173 = scmp.lt.s32.totalorder %s15, 5
        %s174 = scalar_select %p173, %s15, 5
        %s175 = smul.addr %s174, 4
        %s176 = scalar_lea.vmem %s1, %s175
        // Predicated region
        $region29: #{tpu_custom_call.1} parent=23 // pred_check
          %p177 = pneg %p59
        $region30: #{tpu_custom_call.1} parent=23 // pred_check_branch
          %179 = sbr.rel (%p177) target = $region32
        $region31: #{tpu_custom_call.1} parent=23 // pred_region
          _
        $region32: #{tpu_custom_call.1} parent=23 // pred_fallthru
          _
      $region24: #{tpu_custom_call.1} parent=5 // pred_fallthru
        _
      %p180 = scmp.le.s32.totalorder 2, %s10
      // Predicated region
      $region33: #{tpu_custom_call.1} parent=5 // pred_check
        %p181 = pneg %p180
      $region34: #{tpu_custom_call.1} parent=5 // pred_check_branch
        %183 = sbr.rel (%p181) target = $region36
      $region35: #{tpu_custom_call.1} parent=5 // pred_region
        %s184 = ssub.s32 %s10, 2
        // Predicated region
        $region37: #{tpu_custom_call.1} parent=35 // pred_check
          %p185 = pneg %p65
        $region38: #{tpu_custom_call.1} parent=35 // pred_check_branch
          %187 = sbr.rel (%p185) target = $region40
        $region39: #{tpu_custom_call.1} parent=35 // pred_region
          %p188 = scmp.lt.s32.totalorder %s16, 5
          %s189 = scalar_select %p188, %s16, 5
          %s190 = smul.addr %s189, 4
          %s191 = scalar_lea.vmem %s1, %s190
        $region40: #{tpu_custom_call.1} parent=35 // pred_fallthru
          _
      $region36: #{tpu_custom_call.1} parent=5 // pred_fallthru
        _
    $region6: #{tpu_custom_call.1} parent=1 // loop_footer
      %s14 = sadd.s32 1, %s10
    $region7: #{tpu_custom_call.1} parent=1 // loop_footer_branch
      %9 = sbr.rel target = $region3
    $region8: #{tpu_custom_call.1} parent=1 // loop_exit
      _
    %192 = vsyncpa [#allocation3], 1
    %s193 = scalar_lea.sflag [#allocation3], 1
    %194 = vsyncpa %s193, 1

</llo_original>
